<compile_context>
chip_gen: v5e
topology: v5e:2x2
jax: 0.10.0
libtpu: 0.0.40
codegen_flags: <defaults>
</compile_context>

<pallas_src>
import jax
import jax.numpy as jnp
from jax.experimental import pallas as pl
from jax.experimental.pallas import tpu as pltpu

LANE = 128  # TPU lane width


def _round_up(n: int, m: int) -> int:
    return ((n + m - 1) // m) * m


def _rbf_net_kernel(x_ref, p_ref, w2_ref, o_ref):
    """One batch-tile of the fused RBF network.

    x_ref  : (TB, D)    input tile, f32
    p_ref  : (D+1, Kp)  rows 0..D-1 = input_layer.weight.T * (1/sigma),
                        row  D      = centers * (1/sigma); zero-padded, f32
    w2_ref : (Kp, Op)   output linear weight^T, zero-padded rows & cols, f32
    o_ref  : (TB, Op)   lane-dense padded output tile, f32
    """
    x = x_ref[...]                                   # (TB, D)
    p = p_ref[...]                                   # (D+1, Kp)
    d_in = x.shape[1]

    # First linear layer: contraction depth D is tiny (e.g. 4), so unrolled
    # broadcast-FMAs on the VPU beat pushing a nearly-empty contraction
    # through the MXU, and keep the MXU free for the second matmul.
    y = x[:, 0:1] * p[0:1, :]                        # (TB, Kp)
    for d in range(1, d_in):                         # static unroll, D is small
        y = y + x[:, d:d + 1] * p[d:d + 1, :]

    # RBFLayer1D with gaussian basis; sigma is pre-folded into w1 / centers.
    r = jnp.abs(y - p[d_in:d_in + 1, :])             # (TB, Kp)
    phi = jnp.exp(-(r * r))                          # gaussian basis_func

    # Second linear layer on the MXU: lane-dense (Kp x Op) weight tile.
    o_ref[...] = jnp.dot(phi, w2_ref[...],
                         preferred_element_type=jnp.float32).astype(o_ref.dtype)


def extended_rbf_wo_int(x, w1_t, centers, log_sigmas, w2_t,
                        num_points_per_traj, num_output_labels,
                        *, batch_tile=4096):
    """x: (B, input_dim) -> trajectory (B, num_points_per_traj, num_output_labels).

    w1_t: (input_dim, K)   = input_layer.weight.T
    centers, log_sigmas: (1, K)
    w2_t: (K, out_dim)     = linear.weight.T
    """
    B, D = x.shape
    K = w1_t.shape[1]
    out_dim = w2_t.shape[1]
    assert out_dim == num_points_per_traj * num_output_labels

    # ---- one-time parameter prep: fold sigma, pad to lane-dense shapes -----
    Kp = _round_up(K, LANE)
    Op = _round_up(out_dim, LANE)

    inv_sigma = jnp.exp(-log_sigmas.astype(jnp.float32))            # (1, K)
    w1_s = w1_t.astype(jnp.float32) * inv_sigma                     # (D, K)
    c_s = centers.astype(jnp.float32) * inv_sigma                   # (1, K)

    # Stack w1 (scaled) and centers (scaled) into one resident parameter slab.
    p_slab = jnp.zeros((D + 1, Kp), jnp.float32)
    p_slab = p_slab.at[:D, :K].set(w1_s).at[D, :K].set(c_s[0])
    # Padded kernels see phi = exp(-|0-0|^2) = 1, so their w2 rows MUST be 0.
    w2_p = jnp.zeros((Kp, Op), jnp.float32).at[:K, :out_dim].set(
        w2_t.astype(jnp.float32))

    # ---- batch tiling: grid over batch, parameters resident -----------------
    tb = min(batch_tile, _round_up(B, 8))
    Bp = _round_up(B, tb)
    x_p = x.astype(jnp.float32)
    if Bp != B:
        x_p = jnp.zeros((Bp, D), jnp.float32).at[:B, :].set(x_p)

    pred = pl.pallas_call(
        _rbf_net_kernel,
        out_shape=jax.ShapeDtypeStruct((Bp, Op), jnp.float32),
        grid=(Bp // tb,),
        in_specs=[
            pl.BlockSpec((tb, D), lambda i: (i, 0)),       # x: tiled over batch
            pl.BlockSpec((D + 1, Kp), lambda i: (0, 0)),   # w1 + centers: resident
            pl.BlockSpec((Kp, Op), lambda i: (0, 0)),      # w2: resident
        ],
        out_specs=pl.BlockSpec((tb, Op), lambda i: (i, 0)),
        compiler_params=pltpu.CompilerParams(
            dimension_semantics=("parallel",),             # megacore on v7x
        ),
    )(x_p, p_slab, w2_p)

    # pred_to_trajectory: drop batch/lane padding, then reshape (pure glue).
    pred = pred[:B, :out_dim]
    return pred.reshape(-1, num_points_per_traj, num_output_labels)


if __name__ == "__main__":
    # Small, module-consistent shapes.
    input_labels = ["x", "y", "v", "theta"]            # input_dim = 4
    output_labels = ["x", "y", "theta"]                # len = 3
    num_points_per_traj = 8
    num_kernels = 32
    batch = 10                                         # exercises batch padding

    input_dim = len(input_labels)
    output_dim = len(output_labels) * num_points_per_traj

    key = jax.random.PRNGKey(0)
    kx, kw1, kc, kls, kw2 = jax.random.split(key, 5)

    # Deterministic synthetic parameters (shapes match the PyTorch module).
    x = jax.random.normal(kx, (batch, input_dim), dtype=jnp.float32)
    # nn.Linear weight is (out, in); store transposed (in, out) for x @ W.
    w1_t = jax.random.normal(kw1, (input_dim, num_kernels), dtype=jnp.float32) * 0.5
    centers = jax.random.normal(kc, (1, num_kernels), dtype=jnp.float32)
    log_sigmas = jax.random.normal(kls, (1, num_kernels), dtype=jnp.float32) * 0.1
    w2_t = jax.random.normal(kw2, (num_kernels, output_dim), dtype=jnp.float32) * 0.2

    traj = extended_rbf_wo_int(x, w1_t, centers, log_sigmas, w2_t,
                               num_points_per_traj, len(output_labels))
    traj = jax.block_until_ready(traj)

    # Pure-JAX reference check of the fused kernel.
    y_ref = x @ w1_t
    d_ref = jnp.abs(y_ref - centers) / jnp.exp(log_sigmas)
    phi_ref = jnp.exp(-d_ref ** 2)
    ref = (phi_ref @ w2_t).reshape(-1, num_points_per_traj, len(output_labels))
    assert traj.shape == (batch, num_points_per_traj, len(output_labels))
    assert jnp.allclose(traj, ref, atol=1e-5, rtol=1e-5)

    print("KERNEL_OK")
</pallas_src>

<mosaic_0001>
module attributes {stable_mosaic.version = 11 : i64} {
  func.func @_rbf_net_kernel(%arg0: i32, %arg1: memref<16x4xf32, #tpu.memory_space<vmem>>, %arg2: memref<5x128xf32, #tpu.memory_space<vmem>>, %arg3: memref<128x128xf32, #tpu.memory_space<vmem>>, %arg4: memref<16x128xf32, #tpu.memory_space<vmem>>) attributes {dimension_semantics = [#tpu.dimension_semantics<parallel>], iteration_bounds = array<i64: 1>, scalar_prefetch = 0 : i64, scratch_operands = 0 : i64, tpu.core_type = #tpu.core_type<tc>, window_params = [{transform_indices = @transform_0, window_bounds = array<i64: 16, 4>}, {pipeline_mode = #tpu.pipeline_mode<synchronous>, transform_indices = @transform_1, window_bounds = array<i64: 5, 128>}, {pipeline_mode = #tpu.pipeline_mode<synchronous>, transform_indices = @transform_2, window_bounds = array<i64: 128, 128>}, {transform_indices = @transform_3, window_bounds = array<i64: 16, 128>}]} {
    %c0 = arith.constant 0 : index
    %c0_0 = arith.constant 0 : index
    %0 = vector.load %arg1[%c0, %c0_0] : memref<16x4xf32, #tpu.memory_space<vmem>>, vector<16x4xf32>
    %c0_1 = arith.constant 0 : index
    %c0_2 = arith.constant 0 : index
    %1 = vector.load %arg2[%c0_1, %c0_2] : memref<5x128xf32, #tpu.memory_space<vmem>>, vector<5x128xf32>
    %2 = vector.extract_strided_slice %0 {offsets = [0, 0], sizes = [16, 1], strides = [1, 1]} : vector<16x4xf32> to vector<16x1xf32>
    %3 = vector.extract_strided_slice %1 {offsets = [0, 0], sizes = [1, 128], strides = [1, 1]} : vector<5x128xf32> to vector<1x128xf32>
    %4 = vector.broadcast %2 : vector<16x1xf32> to vector<16x128xf32>
    %5 = vector.broadcast %3 : vector<1x128xf32> to vector<16x128xf32>
    %6 = arith.mulf %4, %5 : vector<16x128xf32>
    %7 = vector.extract_strided_slice %0 {offsets = [0, 1], sizes = [16, 1], strides = [1, 1]} : vector<16x4xf32> to vector<16x1xf32>
    %8 = vector.extract_strided_slice %1 {offsets = [1, 0], sizes = [1, 128], strides = [1, 1]} : vector<5x128xf32> to vector<1x128xf32>
    %9 = vector.broadcast %7 : vector<16x1xf32> to vector<16x128xf32>
    %10 = vector.broadcast %8 : vector<1x128xf32> to vector<16x128xf32>
    %11 = arith.mulf %9, %10 : vector<16x128xf32>
    %12 = arith.addf %6, %11 : vector<16x128xf32>
    %13 = vector.extract_strided_slice %0 {offsets = [0, 2], sizes = [16, 1], strides = [1, 1]} : vector<16x4xf32> to vector<16x1xf32>
    %14 = vector.extract_strided_slice %1 {offsets = [2, 0], sizes = [1, 128], strides = [1, 1]} : vector<5x128xf32> to vector<1x128xf32>
    %15 = vector.broadcast %13 : vector<16x1xf32> to vector<16x128xf32>
    %16 = vector.broadcast %14 : vector<1x128xf32> to vector<16x128xf32>
    %17 = arith.mulf %15, %16 : vector<16x128xf32>
    %18 = arith.addf %12, %17 : vector<16x128xf32>
    %19 = vector.extract_strided_slice %0 {offsets = [0, 3], sizes = [16, 1], strides = [1, 1]} : vector<16x4xf32> to vector<16x1xf32>
    %20 = vector.extract_strided_slice %1 {offsets = [3, 0], sizes = [1, 128], strides = [1, 1]} : vector<5x128xf32> to vector<1x128xf32>
    %21 = vector.broadcast %19 : vector<16x1xf32> to vector<16x128xf32>
    %22 = vector.broadcast %20 : vector<1x128xf32> to vector<16x128xf32>
    %23 = arith.mulf %21, %22 : vector<16x128xf32>
    %24 = arith.addf %18, %23 : vector<16x128xf32>
    %25 = vector.extract_strided_slice %1 {offsets = [4, 0], sizes = [1, 128], strides = [1, 1]} : vector<5x128xf32> to vector<1x128xf32>
    %26 = vector.broadcast %25 : vector<1x128xf32> to vector<16x128xf32>
    %27 = arith.subf %24, %26 : vector<16x128xf32>
    %28 = math.absf %27 : vector<16x128xf32>
    %29 = arith.mulf %28, %28 : vector<16x128xf32>
    %cst = arith.constant 0.000000e+00 : f32
    %30 = vector.broadcast %cst : f32 to vector<16x128xf32>
    %31 = arith.subf %30, %29 : vector<16x128xf32>
    %32 = math.exp %31 : vector<16x128xf32>
    %c0_3 = arith.constant 0 : index
    %c0_4 = arith.constant 0 : index
    %33 = vector.load %arg3[%c0_3, %c0_4] : memref<128x128xf32, #tpu.memory_space<vmem>>, vector<128x128xf32>
    %cst_5 = arith.constant dense<0.000000e+00> : vector<16x128xf32>
    %34 = tpu.matmul %32, %33, %cst_5 {dimension_numbers = #tpu.dot_dimension_numbers<[1], [0], [0], [1], [0, 0, 1, 1], [], []>} : vector<16x128xf32>, vector<128x128xf32>, vector<16x128xf32> -> vector<16x128xf32>
    %c0_6 = arith.constant 0 : index
    %c0_7 = arith.constant 0 : index
    %35 = vector.load %arg4[%c0_6, %c0_7] : memref<16x128xf32, #tpu.memory_space<vmem>>, vector<16x128xf32>
    tpu.vector_store %arg4[%c0_6, %c0_7], %34 {strides = array<i32>} : memref<16x128xf32, #tpu.memory_space<vmem>>, vector<16x128xf32>,
    return
  }
  func.func @transform_0(%arg0: i32) -> (i32, i32) {
    %c0_i32 = arith.constant 0 : i32
    %c0_i32_0 = arith.constant 0 : i32
    return %arg0, %c0_i32 : i32, i32
  }
  func.func @transform_1(%arg0: i32) -> (i32, i32) {
    %c0_i32 = arith.constant 0 : i32
    %c0_i32_0 = arith.constant 0 : i32
    %c0_i32_1 = arith.constant 0 : i32
    return %c0_i32, %c0_i32_0 : i32, i32
  }
  func.func @transform_2(%arg0: i32) -> (i32, i32) {
    %c0_i32 = arith.constant 0 : i32
    %c0_i32_0 = arith.constant 0 : i32
    %c0_i32_1 = arith.constant 0 : i32
    return %c0_i32, %c0_i32_0 : i32, i32
  }
  func.func @transform_3(%arg0: i32) -> (i32, i32) {
    %c0_i32 = arith.constant 0 : i32
    %c0_i32_0 = arith.constant 0 : i32
    return %arg0, %c0_i32 : i32, i32
  }
}

</mosaic_0001>

<llo_original>
// kernel: tpu_custom_call.1
$region0: #{tpu_custom_call.1}
  #allocation0 [shape = 'u32[]', space=smem, size = 0x4, offset = 0x4, fixed_abs, tag = 'smem constant byte address 0x4 - core index']
  #allocation1 [shape = 'u32[72,128]{1,0:T(1,128)}', space=vmem, size = 0x9000, scoped, tag = 'internal scratch']
  %s0 = inlined_call_operand.vmem [shape: f32[16,4], index: 0, kind: input, shape index: {}]
  %s1 = inlined_call_operand.vmem [shape: f32[5,128], index: 1, kind: input, shape index: {}]
  %s2 = inlined_call_operand.hbm [shape: f32[128,128], index: 2, kind: input, shape index: {}]
  %s3 = inlined_call_operand.hbm [shape: f32[16,128], index: 3, kind: output, shape index: {}]
  %s4 = sld [smem:[#allocation0]]
  $region26: #{tpu_custom_call.1} parent=0
    _
  %s6 = ssub.s32 1, %s4
  %s7 = scalar_select 0, %s6, %s4
  $region1: #{tpu_custom_call.1} parent=0
    #allocation2 [shape = 'u8[65536]{0}', space=vmem, size = 0x10000, scoped, tag = 'input window, operand 2, single buffered']
    #allocation3 [shape = 's32[1]{0}', space=sflag, size = 0x4, scoped, tag = 'scoped memory for tpu_custom_call.1']
    #allocation4 [shape = 's32[1]{0}', space=sflag, size = 0x4, scoped, tag = 'scoped memory for tpu_custom_call.1']
    #allocation5 [shape = 'u8[8192]{0}', space=vmem, size = 0x2000, scoped, tag = 'output window, operand 0, single buffered']
    %8 = vsyncpa [#allocation3], 0
    %9 = vsyncpa [#allocation4], 0
    // Predicated region
    $region2: #{tpu_custom_call.1} parent=1 // pred_check
      _
    $region3: #{tpu_custom_call.1} parent=1 // pred_check_branch
      %11 = sbr.rel (0) target = $region5
    $region4: #{tpu_custom_call.1} parent=1 // pred_region
      _
    $region5: #{tpu_custom_call.1} parent=1 // pred_fallthru
      _
    // Predicated region
    $region6: #{tpu_custom_call.1} parent=1 // pred_check
      _
    $region7: #{tpu_custom_call.1} parent=1 // pred_check_branch
      %13 = sbr.rel (0) target = $region9
    $region8: #{tpu_custom_call.1} parent=1 // pred_region
      _
    $region9: #{tpu_custom_call.1} parent=1 // pred_fallthru
      _
    // Predicated region
    $region10: #{tpu_custom_call.1} parent=1 // pred_check
      _
    $region11: #{tpu_custom_call.1} parent=1 // pred_check_branch
      %15 = sbr.rel (0) target = $region13
    $region12: #{tpu_custom_call.1} parent=1 // pred_region
      %17 = vsyncadd [#allocation3], 0
      %s18 = sshll.u32 %s2, 4
      %s19 = int_to_ptr.hbm [resolvable:$true] %s18
      %s20 = sshll.u32 [#allocation2], 4
      %s21 = int_to_ptr.vmem [resolvable:$true] %s20
      %26 = dma.hbm_to_vmem [thread:$0]  %s19, 2048, %s21, [#allocation3], 128, 128, 8
    $region13: #{tpu_custom_call.1} parent=1 // pred_fallthru
      _
    // Predicated region
    $region14: #{tpu_custom_call.1} parent=1 // pred_check
      _
    $region15: #{tpu_custom_call.1} parent=1 // pred_check_branch
      %28 = sbr.rel (0) target = $region17
    $region16: #{tpu_custom_call.1} parent=1 // pred_region
      %30 = dma.done [#allocation3], 2048
    $region17: #{tpu_custom_call.1} parent=1 // pred_fallthru
      _
    %v31 = vld [vmem:[%s0] sm:$0xff]
    %v32 = vld [vmem:[%s0 + $0x8] sm:$0xff]
    %v33 = vld [vmem:[%s1] sm:$0x1f]
    %35 = vset.pattern.permute.xlu0 0
    %36 = vperm.xlu0 %35, %v31
    %v37 = vpop.permute.xlu0 %36
    %40 = vset.pattern.permute.xlu0 0
    %41 = vperm.xlu0 %40, %v32
    %v42 = vpop.permute.xlu0 %41
    %v44 = vperm.slane %v33, 0
    %v45 = vmul.f32 %v37, %v44
    %v46 = vmul.f32 %v42, %v44
    %47 = vset.pattern.permute.xlu0 1
    %48 = vperm.xlu0 %47, %v31
    %v49 = vpop.permute.xlu0 %48
    %51 = vset.pattern.permute.xlu0 1
    %52 = vperm.xlu0 %51, %v32
    %v53 = vpop.permute.xlu0 %52
    %v55 = vperm.slane %v33, 1
    %v56 = vmul.f32 %v49, %v55
    %v57 = vmul.f32 %v53, %v55
    %v58 = vadd.f32 %v45, %v56
    %v59 = vadd.f32 %v46, %v57
    %60 = vset.pattern.permute.xlu0 2
    %61 = vperm.xlu0 %60, %v31
    %v62 = vpop.permute.xlu0 %61
    %64 = vset.pattern.permute.xlu0 2
    %65 = vperm.xlu0 %64, %v32
    %v66 = vpop.permute.xlu0 %65
    %v68 = vperm.slane %v33, 2
    %v69 = vmul.f32 %v62, %v68
    %v70 = vmul.f32 %v66, %v68
    %v71 = vadd.f32 %v58, %v69
    %v72 = vadd.f32 %v59, %v70
    %73 = vset.pattern.permute.xlu0 3
    %74 = vperm.xlu0 %73, %v31
    %v75 = vpop.permute.xlu0 %74
    %77 = vset.pattern.permute.xlu0 3
    %78 = vperm.xlu0 %77, %v32
    %v79 = vpop.permute.xlu0 %78
    %v81 = vperm.slane %v33, 3
    %v82 = vmul.f32 %v75, %v81
    %v83 = vmul.f32 %v79, %v81
    %v84 = vadd.f32 %v71, %v82
    %v85 = vadd.f32 %v72, %v83
    %v86 = vperm.slane %v33, 4
    %v87 = vsub.f32 %v84, %v86
    %v88 = vsub.f32 %v85, %v86
    %v89 = vand.u32 2147483647, %v87
    %v90 = vand.u32 2147483647, %v88
    %v91 = vmul.f32 %v89, %v89
    %v92 = vmul.f32 %v90, %v90
    %v93 = vsub.f32 0.0, %v91
    %v94 = vsub.f32 0.0, %v92
    %v95 = vmul.f32 %v93, 1.442695
    %v96 = vpow.pop %v95
    %v97 = vmul.f32 %v94, 1.442695
    %v98 = vpow.pop %v97
    %v99 = vld [vmem:[#allocation2] sm:$0xff]
    %v100 = vld [vmem:[#allocation2 + $0x8] sm:$0xff]
    %v101 = vld [vmem:[#allocation2 + $0x10] sm:$0xff]
    %v102 = vld [vmem:[#allocation2 + $0x18] sm:$0xff]
    %v103 = vld [vmem:[#allocation2 + $0x20] sm:$0xff]
    %v104 = vld [vmem:[#allocation2 + $0x28] sm:$0xff]
    %v105 = vld [vmem:[#allocation2 + $0x30] sm:$0xff]
    %v106 = vld [vmem:[#allocation2 + $0x38] sm:$0xff]
    %v107 = vld [vmem:[#allocation2 + $0x40] sm:$0xff]
    %v108 = vld [vmem:[#allocation2 + $0x48] sm:$0xff]
    %v109 = vld [vmem:[#allocation2 + $0x50] sm:$0xff]
    %v110 = vld [vmem:[#allocation2 + $0x58] sm:$0xff]
    %v111 = vld [vmem:[#allocation2 + $0x60] sm:$0xff]
    %v112 = vld [vmem:[#allocation2 + $0x68] sm:$0xff]
    %v113 = vld [vmem:[#allocation2 + $0x70] sm:$0xff]
    %v114 = vld [vmem:[#allocation2 + $0x78] sm:$0xff]
    %115 = vmatpush.msra.mxu0 %v114
    %116 = vmatpush.msra.mxu0 %v113
    %117 = vmatpush.msra.mxu0 %v112
    %118 = vmatpush.msra.mxu0 %v111
    %119 = vmatpush.msra.mxu0 %v110
    %120 = vmatpush.msra.mxu0 %v109
    %121 = vmatpush.msra.mxu0 %v108
    %122 = vmatpush.msra.mxu0 %v107
    %123 = vmatpush.msra.mxu0 %v106
    %124 = vmatpush.msra.mxu0 %v105
    %125 = vmatpush.msra.mxu0 %v104
    %126 = vmatpush.msra.mxu0 %v103
    %127 = vmatpush.msra.mxu0 %v102
    %128 = vmatpush.msra.mxu0 %v101
    %129 = vmatpush.msra.mxu0 %v100
    %130 = vmatpush.msra.mxu0 %v99
    %131 = vmatmul.f32.gmra.mxu0 %v96
    %v132 = vpop.f32.mrf.mxu0
    %v133 = vadd.f32 0.0, %v132
    %134 = vmatmul.f32.gmra.mxu0 %v98
    %v135 = vpop.f32.mrf.mxu0
    %v136 = vadd.f32 0.0, %v135
    %137 = vdwg.mxu0
    %138 = vst [vmem:[#allocation5] sm:$0xff] %v133
    %139 = vst [vmem:[#allocation5 + $0x8] sm:$0xff] %v136
    // Predicated region
    $region18: #{tpu_custom_call.1} parent=1 // pred_check
      _
    $region19: #{tpu_custom_call.1} parent=1 // pred_check_branch
      %141 = sbr.rel (0) target = $region21
    $region20: #{tpu_custom_call.1} parent=1 // pred_region
      %143 = vsyncadd [#allocation4], 0
      %s144 = sshll.u32 [#allocation5], 4
      %s145 = int_to_ptr.vmem [resolvable:$true] %s144
      %s146 = sshll.u32 %s3, 4
      %s147 = int_to_ptr.hbm [resolvable:$true] %s146
      %152 = dma.vmem_to_hbm [thread:$0]  %s145, 256, %s147, [#allocation4], 128, 128, 8
    $region21: #{tpu_custom_call.1} parent=1 // pred_fallthru
      _
    // Predicated region
    $region22: #{tpu_custom_call.1} parent=1 // pred_check
      _
    $region23: #{tpu_custom_call.1} parent=1 // pred_check_branch
      %154 = sbr.rel (0) target = $region25
    $region24: #{tpu_custom_call.1} parent=1 // pred_region
      %156 = dma.done [#allocation4], 256
    $region25: #{tpu_custom_call.1} parent=1 // pred_fallthru
      _
    %157 = vsyncpa [#allocation3], 1
    %158 = vsyncpa [#allocation4], 1

</llo_original>
